<compile_context>
chip_gen: v6e
topology: v6e:2x2x1
jax: 0.10.0
libtpu: 0.0.40
codegen_flags: <defaults>
</compile_context>

<pallas_src>
import functools

import jax
import jax.numpy as jnp
from jax.experimental import pallas as pl
from jax.experimental.pallas import tpu as pltpu


def _round_up(v, m):
    return ((v + m - 1) // m) * m


def _choose_tiling(hw, target):
    """Return (tile, padded_hw): lane-dense (multiple-of-128) spatial tiles."""
    target = max(128, (target // 128) * 128)
    hw128 = _round_up(hw, 128)
    if hw128 <= target:
        return hw128, hw128                       # single tile covers the map
    # Prefer a reasonably large divisor of the 128-padded extent (no padding
    # waste beyond the 128-rounding).
    t = target
    while t >= 512:
        if hw128 % t == 0:
            return t, hw128
        t -= 128
    # Otherwise pad HW up to a multiple of the target tile (keeps every store
    # lane-dense and VMEM bounded; the pad is sliced off in the wrapper).
    return target, _round_up(hw, target)


def _scatter_kernel(cnt_ref, idx_ref, x_ref, o_ref, xs_ref, idxc_ref, *,
                    tile_hw, chunk, n_sp, compute_dtype):
    """One (batch b, spatial tile j) grid step.

    cnt_ref : (B*n_sp,) int32 SMEM  entities landing in tile (b, j)
    idx_ref : (1, 1, Mp) int32      flat spatial index per entity (-1 = off)
    x_ref   : (1, Mp, N)            entity embeddings (resident across j)
    o_ref   : (1, N, T)             current spatial window of the output
    xs_ref  : (Mp, N) compute       scratch: per-batch cast of x
    idxc_ref: (Mp, 1) int32         scratch: per-batch column layout of idx
    """
    b = pl.program_id(0)
    j = pl.program_id(1)

    # Per-batch (spatial-step-invariant) work, done once at the first tile:
    # cast x to the MXU feed dtype, lay the indices out as a column.
    @pl.when(j == 0)
    def _():
        xs_ref[...] = x_ref[0].astype(compute_dtype)
        idxc_ref[...] = jnp.transpose(idx_ref[0])            # (Mp, 1), tiny XLU

    cnt = cnt_ref[b * n_sp + j]

    @pl.when(cnt == 0)
    def _():
        # No entity lands in this spatial window: skip all VPU/MXU work.
        o_ref[...] = jnp.zeros_like(o_ref)

    @pl.when(cnt > 0)
    def _():
        mp = xs_ref.shape[0]
        x = xs_ref[...]                                      # (Mp, N)
        # Shift the indices instead of the iota: M subtracts per chunk instead
        # of M*chunk adds on the VPU; the iota below is a per-chunk constant.
        idx_rel = idxc_ref[...] - j * tile_hw                # (Mp, 1)
        iota = jax.lax.broadcasted_iota(jnp.int32, (mp, chunk), 1)

        def body(c, carry):
            start = pl.multiple_of(c * chunk, chunk)
            onehot = (iota == (idx_rel - start)).astype(compute_dtype)  # (Mp,C)
            # out[n, t] = sum_m x[m, n] * onehot[m, t] -- contract M directly
            # on the MXU (no explicit transpose of x), accumulate in f32.
            out = jax.lax.dot_general(
                x, onehot,
                dimension_numbers=(((0,), (0,)), ((), ())),
                preferred_element_type=jnp.float32)          # (N, C)
            o_ref[0, :, pl.ds(start, chunk)] = out.astype(o_ref.dtype)
            return carry

        # TODO(synk): on v7x, verify with pl.lower_as_mlir that the dim-0/dim-0
        # dot_general does not relayout x per chunk; if it does, store x
        # transposed (N, Mp) in xs_ref once per batch instead.
        jax.lax.fori_loop(0, tile_hw // chunk, body, 0, unroll=True)


def scatter_connection(x, spatial_size, location, scatter_type="add", *,
                       compute_dtype=jnp.bfloat16, out_dtype=None,
                       spatial_tile=2048):
    """AlphaStar ScatterConnection forward.

    x        : (B, M, N) entity embeddings.
    location : (B, M, 2) integer (y, x) coordinates.
    returns  : (B, N, H, W).

    compute_dtype: MXU feed dtype. bf16 (default) is fastest; pass
      jnp.float32 for exact parity with the f32 PyTorch module (relevant for
      'cover', which is semantically a pure copy of x).
    out_dtype: output dtype (default x.dtype). bf16 halves the HBM writeback,
      the bottleneck on v5e.
    spatial_tile: target lane width of one output tile. 2048 is safe on every
      generation (v7x has 64 MiB VMEM per TensorCore); 4096-8192 helps on v6e
      for very large maps (intermediates do not grow with it thanks to the
      in-kernel chunking).

    Out-of-range locations are dropped silently (torch would raise); padded /
    deduplicated entities are dropped the same way via a flat index of -1.
    """
    assert scatter_type in ("add", "cover")
    B, M, N = x.shape
    H, W = spatial_size
    HW = H * W
    out_dtype = x.dtype if out_dtype is None else out_dtype

    # ---- cheap JAX glue: flat index, dedup, padding, per-tile counts -------
    idx = (location[:, :, 1] + location[:, :, 0] * W).astype(jnp.int32)  # (B,M)
    idx = jnp.where((idx >= 0) & (idx < HW), idx, -1)      # drop out-of-range

    if scatter_type == "cover":
        # Deterministic "last entity wins": any entity with a later duplicate
        # at the same location gets index -1 (its one-hot row becomes zero).
        same = idx[:, :, None] == idx[:, None, :]                    # (B,M,M)
        later = jnp.arange(M)[None, None, :] > jnp.arange(M)[None, :, None]
        dup_later = jnp.any(same & later, axis=-1)                   # (B,M)
        idx = jnp.where(dup_later, -1, idx)

    # Pad the entity (MXU contraction) axis to a multiple of 16 so the bf16
    # path gets full sublane packing; padded entities get index -1.
    # (For very large misaligned M, aligning to 128 avoids partial MXU passes.)
    m_pad = (-M) % 16
    if m_pad:
        idx = jnp.pad(idx, ((0, 0), (0, m_pad)), constant_values=-1)
        x = jnp.pad(x, ((0, 0), (0, m_pad), (0, 0)))
    Mp = M + m_pad

    thw, HWp = _choose_tiling(HW, spatial_tile)
    n_sp = HWp // thw
    chunk = 512 if thw % 512 == 0 else (256 if thw % 256 == 0 else 128)

    # Per-(batch, spatial tile) entity counts -> SMEM scalar prefetch; used to
    # skip spatial tiles no entity hits (sparse maps: M << HW).
    tile_of = jnp.where(idx >= 0, idx // thw, n_sp)        # n_sp == drop bucket
    counts = jnp.zeros((B, n_sp + 1), jnp.int32).at[
        jnp.arange(B)[:, None], tile_of].add(1)[:, :n_sp]
    counts = counts.reshape(-1)                            # (B*n_sp,) 1-D SMEM

    idx = idx[:, None, :]                                  # (B, 1, Mp) lane-dense

    # ---- explicit VMEM budget: pipelined blocks + scratch + chunk work -----
    ob = jnp.dtype(out_dtype).itemsize
    xb = jnp.dtype(x.dtype).itemsize
    cb = jnp.dtype(compute_dtype).itemsize
    vmem_bytes = (2 * N * thw * ob                    # output block (x2 bufs)
                  + 2 * Mp * N * xb                   # x block (x2 bufs)
                  + 2 * 8 * _round_up(Mp, 128) * 4    # idx block (tile-padded)
                  + Mp * N * cb                       # xs scratch
                  + _round_up(Mp, 8) * 128 * 4        # idx column scratch
                  + Mp * chunk * (4 + cb)             # iota + one-hot chunk
                  + N * chunk * 4)                    # f32 result chunk
    vmem_limit = int(min(2 * vmem_bytes + (8 << 20), 96 << 20))

    kernel = functools.partial(_scatter_kernel, tile_hw=thw, chunk=chunk,
                               n_sp=n_sp, compute_dtype=compute_dtype)

    out = pl.pallas_call(
        kernel,
        out_shape=jax.ShapeDtypeStruct((B, N, HWp), out_dtype),
        grid_spec=pltpu.PrefetchScalarGridSpec(
            num_scalar_prefetch=1,                   # per-tile entity counts
            grid=(B, n_sp),                          # spatial axis innermost:
            in_specs=[                               # x / idx stay VMEM-resident
                pl.BlockSpec((1, 1, Mp), lambda b, j, cnt: (b, 0, 0)),   # idx
                pl.BlockSpec((1, Mp, N), lambda b, j, cnt: (b, 0, 0)),   # x
            ],
            out_specs=pl.BlockSpec((1, N, thw), lambda b, j, cnt: (b, 0, j)),
            scratch_shapes=[
                pltpu.VMEM((Mp, N), compute_dtype),  # per-batch cast of x
                pltpu.VMEM((Mp, 1), jnp.int32),      # per-batch idx column
            ]),
        compiler_params=pltpu.CompilerParams(
            # B parallel (v7x megacore splits along batch, each core keeps its
            # own x/idx resident); spatial axis "arbitrary" so every core
            # sweeps j = 0..n_sp-1 in order (the j == 0 scratch fill relies
            # on that ordering).
            dimension_semantics=("parallel", "arbitrary"),
            vmem_limit_bytes=vmem_limit),
        cost_estimate=pl.CostEstimate(
            flops=2 * B * Mp * N * HWp,
            transcendentals=0,
            bytes_accessed=(B * Mp * N * xb + B * Mp * 4 + B * n_sp * 4
                            + B * N * HWp * ob)),
    )(counts, idx, x)

    if HWp != HW:
        out = out[:, :, :HW]
    return out.reshape(B, N, H, W)


if __name__ == "__main__":
    key = jax.random.PRNGKey(0)
    B, M, N = 2, 8, 32          # batch, num entities, embedding size
    H, W = 16, 16               # spatial size

    kx, ky, kxx = jax.random.split(key, 3)
    x = jax.random.normal(kx, (B, M, N), dtype=jnp.float32)
    loc_y = jax.random.randint(ky, (B, M, 1), 0, H)
    loc_x = jax.random.randint(kxx, (B, M, 1), 0, W)
    location = jnp.concatenate([loc_y, loc_x], axis=-1)     # (B, M, 2), (y, x)

    def ref_add(xv, idxv, hw):
        return jax.vmap(
            lambda xb, ib: jnp.zeros((N, hw), jnp.float32).at[:, ib].add(xb.T)
        )(xv, idxv)

    idx = (location[:, :, 1] + location[:, :, 0] * W).astype(jnp.int32)

    # 1) "add", default bf16 MXU feed (reference uses the same bf16-rounded x;
    #    the 0/1 one-hot is exact in bf16, accumulation is f32).
    out = jax.block_until_ready(scatter_connection(x, (H, W), location, "add"))
    assert out.shape == (B, N, H, W)
    xq = x.astype(jnp.bfloat16).astype(jnp.float32)
    ref = ref_add(xq, idx, H * W).reshape(B, N, H, W)
    assert jnp.allclose(out, ref, atol=1e-5), "Pallas scatter-add mismatch"

    # 2) "cover" with f32 compute for exact parity: deterministic
    #    last-entity-wins on collisions.
    out_c = jax.block_until_ready(
        scatter_connection(x, (H, W), location, "cover",
                           compute_dtype=jnp.float32))
    same = idx[:, :, None] == idx[:, None, :]
    later = jnp.arange(M)[None, None, :] > jnp.arange(M)[None, :, None]
    keep = (~jnp.any(same & later, axis=-1)).astype(jnp.float32)      # (B, M)
    ref_c = ref_add(x * keep[:, :, None], idx, H * W).reshape(B, N, H, W)
    assert jnp.allclose(out_c, ref_c, atol=1e-5), "Pallas scatter-cover mismatch"

    # 3) irregular spatial size: exercises HW padding + lane-dense tiles.
    H2, W2 = 13, 11
    loc2 = jnp.concatenate(
        [jax.random.randint(ky, (B, M, 1), 0, H2),
         jax.random.randint(kxx, (B, M, 1), 0, W2)], axis=-1)
    out2 = jax.block_until_ready(
        scatter_connection(x, (H2, W2), loc2, "add",
                           compute_dtype=jnp.float32))
    idx2 = (loc2[:, :, 1] + loc2[:, :, 0] * W2).astype(jnp.int32)
    ref2 = ref_add(x, idx2, H2 * W2).reshape(B, N, H2, W2)
    assert jnp.allclose(out2, ref2, atol=1e-5), "irregular-HW mismatch"

    # 4) sparse map with multiple spatial tiles: exercises the scalar-prefetch
    #    empty-tile skip and the chunked inner loop.
    H3, W3 = 64, 64
    loc3 = jnp.concatenate(
        [jax.random.randint(ky, (B, M, 1), 0, H3),
         jax.random.randint(kxx, (B, M, 1), 0, W3)], axis=-1)
    out3 = jax.block_until_ready(
        scatter_connection(x, (H3, W3), loc3, "add",
                           compute_dtype=jnp.float32))
    idx3 = (loc3[:, :, 1] + loc3[:, :, 0] * W3).astype(jnp.int32)
    ref3 = ref_add(x, idx3, H3 * W3).reshape(B, N, H3, W3)
    assert jnp.allclose(out3, ref3, atol=1e-5), "sparse-map mismatch"

    print("KERNEL_OK")
</pallas_src>

<mosaic_0001>
module attributes {stable_mosaic.version = 11 : i64} {
  func.func @_scatter_kernel(%arg0: i32, %arg1: i32, %arg2: memref<2xi32, #tpu.memory_space<smem>>, %arg3: memref<1x1x16xi32, #tpu.memory_space<vmem>>, %arg4: memref<1x16x32xf32, #tpu.memory_space<vmem>>, %arg5: memref<1x32x256xf32, #tpu.memory_space<vmem>>, %arg6: memref<16x32xbf16, #tpu.memory_space<vmem>>, %arg7: memref<16x1xi32, #tpu.memory_space<vmem>>) attributes {dimension_semantics = [#tpu.dimension_semantics<parallel>, #tpu.dimension_semantics<arbitrary>], iteration_bounds = array<i64: 2, 1>, scalar_prefetch = 1 : i64, scratch_operands = 2 : i64, tpu.core_type = #tpu.core_type<tc>, window_params = [{transform_indices = @transform_0, window_bounds = array<i64: 1, 1, 16>}, {transform_indices = @transform_1, window_bounds = array<i64: 1, 16, 32>}, {transform_indices = @transform_2, window_bounds = array<i64: 1, 32, 256>}]} {
    %c0_i32 = arith.constant 0 : i32
    %0 = arith.cmpi eq, %arg1, %c0_i32 : i32
    %1 = arith.extui %0 : i1 to i32
    %c0_i32_0 = arith.constant 0 : i32
    %2 = arith.cmpi ne, %1, %c0_i32_0 : i32
    scf.if %2 {
      %c0 = arith.constant 0 : index
      %c0_5 = arith.constant 0 : index
      %c0_6 = arith.constant 0 : index
      %13 = vector.load %arg4[%c0, %c0_5, %c0_6] : memref<1x16x32xf32, #tpu.memory_space<vmem>>, vector<1x16x32xf32>
      %14 = vector.shape_cast %13 : vector<1x16x32xf32> to vector<16x32xf32>
      %15 = arith.truncf %14 : vector<16x32xf32> to vector<16x32xbf16>
      %c0_7 = arith.constant 0 : index
      %c0_8 = arith.constant 0 : index
      %16 = vector.load %arg6[%c0_7, %c0_8] : memref<16x32xbf16, #tpu.memory_space<vmem>>, vector<16x32xbf16>
      tpu.vector_store %arg6[%c0_7, %c0_8], %15 {strides = array<i32>} : memref<16x32xbf16, #tpu.memory_space<vmem>>, vector<16x32xbf16>,
      %c0_9 = arith.constant 0 : index
      %c0_10 = arith.constant 0 : index
      %c0_11 = arith.constant 0 : index
      %17 = vector.load %arg3[%c0_9, %c0_10, %c0_11] : memref<1x1x16xi32, #tpu.memory_space<vmem>>, vector<1x1x16xi32>
      %18 = vector.shape_cast %17 : vector<1x1x16xi32> to vector<1x16xi32>
      %19 = tpu.transpose %18, [1, 0] : vector<1x16xi32> -> vector<16x1xi32>
      %c0_12 = arith.constant 0 : index
      %c0_13 = arith.constant 0 : index
      %20 = vector.load %arg7[%c0_12, %c0_13] : memref<16x1xi32, #tpu.memory_space<vmem>>, vector<16x1xi32>
      tpu.vector_store %arg7[%c0_12, %c0_13], %19 {strides = array<i32>} : memref<16x1xi32, #tpu.memory_space<vmem>>, vector<16x1xi32>,
    } else {
    }
    %c1_i32 = arith.constant 1 : i32
    %3 = arith.muli %arg0, %c1_i32 : i32
    %4 = arith.addi %3, %arg1 : i32
    %5 = arith.index_cast %4 : i32 to index
    %6 = memref.load %arg2[%5] : memref<2xi32, #tpu.memory_space<smem>>
    %c0_i32_1 = arith.constant 0 : i32
    %7 = arith.cmpi eq, %6, %c0_i32_1 : i32
    %8 = arith.extui %7 : i1 to i32
    %c0_i32_2 = arith.constant 0 : i32
    %9 = arith.cmpi ne, %8, %c0_i32_2 : i32
    scf.if %9 {
      %cst = arith.constant 0.000000e+00 : f32
      %13 = vector.broadcast %cst : f32 to vector<1x32x256xf32>
      %c0 = arith.constant 0 : index
      %c0_5 = arith.constant 0 : index
      %c0_6 = arith.constant 0 : index
      %14 = vector.load %arg5[%c0, %c0_5, %c0_6] : memref<1x32x256xf32, #tpu.memory_space<vmem>>, vector<1x32x256xf32>
      tpu.vector_store %arg5[%c0, %c0_5, %c0_6], %13 {strides = array<i32>} : memref<1x32x256xf32, #tpu.memory_space<vmem>>, vector<1x32x256xf32>,
    } else {
    }
    %c0_i32_3 = arith.constant 0 : i32
    %10 = arith.cmpi sgt, %6, %c0_i32_3 : i32
    %11 = arith.extui %10 : i1 to i32
    %c0_i32_4 = arith.constant 0 : i32
    %12 = arith.cmpi ne, %11, %c0_i32_4 : i32
    scf.if %12 {
      %c0 = arith.constant 0 : index
      %c0_5 = arith.constant 0 : index
      %13 = vector.load %arg6[%c0, %c0_5] : memref<16x32xbf16, #tpu.memory_space<vmem>>, vector<16x32xbf16>
      %c0_6 = arith.constant 0 : index
      %c0_7 = arith.constant 0 : index
      %14 = vector.load %arg7[%c0_6, %c0_7] : memref<16x1xi32, #tpu.memory_space<vmem>>, vector<16x1xi32>
      %c256_i32 = arith.constant 256 : i32
      %15 = arith.muli %arg1, %c256_i32 : i32
      %16 = vector.broadcast %15 : i32 to vector<16x1xi32>
      %17 = arith.subi %14, %16 : vector<16x1xi32>
      %18 = tpu.iota {dimensions = array<i32: 1>} : vector<16x256xi32>
      %c0_i32_8 = arith.constant 0 : i32
      %c256_i32_9 = arith.constant 256 : i32
      %19 = arith.muli %c0_i32_8, %c256_i32_9 : i32
      %20 = tpu.assume_multiple %19, 256 : i32
      %21 = vector.broadcast %20 : i32 to vector<16x1xi32>
      %22 = arith.subi %17, %21 : vector<16x1xi32>
      %23 = vector.broadcast %22 : vector<16x1xi32> to vector<16x256xi32>
      %24 = arith.cmpi eq, %18, %23 : vector<16x256xi32>
      %25 = arith.extui %24 : vector<16x256xi1> to vector<16x256xi32>
      %26 = arith.sitofp %25 : vector<16x256xi32> to vector<16x256xf32>
      %27 = arith.truncf %26 : vector<16x256xf32> to vector<16x256xbf16>
      %cst = arith.constant dense<0.000000e+00> : vector<32x256xf32>
      %28 = tpu.matmul %13, %27, %cst {dimension_numbers = #tpu.dot_dimension_numbers<[0], [0], [1], [1], [0, 1, 1, 1], [], []>} : vector<16x32xbf16>, vector<16x256xbf16>, vector<32x256xf32> -> vector<32x256xf32>
      %c0_10 = arith.constant 0 : index
      %c0_11 = arith.constant 0 : index
      %29 = arith.index_cast %20 : i32 to index
      %30 = vector.load %arg5[%c0_10, %c0_11, %29] : memref<1x32x256xf32, #tpu.memory_space<vmem>>, vector<1x32x256xf32>
      %31 = vector.shape_cast %30 : vector<1x32x256xf32> to vector<32x256xf32>
      %32 = vector.shape_cast %28 : vector<32x256xf32> to vector<1x32x256xf32>
      tpu.vector_store %arg5[%c0_10, %c0_11, %29], %32 {strides = array<i32>} : memref<1x32x256xf32, #tpu.memory_space<vmem>>, vector<1x32x256xf32>,
      %c1_i32_12 = arith.constant 1 : i32
    } else {
    }
    return
  }
  func.func @transform_0(%arg0: i32, %arg1: i32, %arg2: memref<2xi32, #tpu.memory_space<smem>>) -> (i32, i32, i32) {
    %c0_i32 = arith.constant 0 : i32
    %c0_i32_0 = arith.constant 0 : i32
    %c0_i32_1 = arith.constant 0 : i32
    return %arg0, %c0_i32, %c0_i32_0 : i32, i32, i32
  }
  func.func @transform_1(%arg0: i32, %arg1: i32, %arg2: memref<2xi32, #tpu.memory_space<smem>>) -> (i32, i32, i32) {
    %c0_i32 = arith.constant 0 : i32
    %c0_i32_0 = arith.constant 0 : i32
    %c0_i32_1 = arith.constant 0 : i32
    return %arg0, %c0_i32, %c0_i32_0 : i32, i32, i32
  }
  func.func @transform_2(%arg0: i32, %arg1: i32, %arg2: memref<2xi32, #tpu.memory_space<smem>>) -> (i32, i32, i32) {
    %c0_i32 = arith.constant 0 : i32
    %c0_i32_0 = arith.constant 0 : i32
    return %arg0, %c0_i32, %arg1 : i32, i32, i32
  }
}

</mosaic_0001>

<llo_original>
// kernel: tpu_custom_call.1
$region0: #{tpu_custom_call.1}
  #allocation0 [shape = 'u32[]', space=smem, size = 0x4, offset = 0x4, fixed_abs, tag = 'smem constant byte address 0x4 - core index']
  #allocation1 [shape = 'u32[144,128]{1,0:T(1,128)}', space=vmem, size = 0x12000, scoped, tag = 'internal scratch']
  #allocation2 [shape = 'bf16[16,32]{1,0:T(8,128)(2,1)}', space=vmem, size = 0x1000, scoped, tag = 'scratch operand']
  #allocation3 [shape = 's32[16,1]{1,0:T(8,128)}', space=vmem, size = 0x2000, scoped, tag = 'scratch operand']
  #allocation4 [shape = 's32[1]{0}', space=sflag, size = 0x4, scoped, tag = 'scoped memory for tpu_custom_call.1']
  #allocation5 [shape = 'u8[512]{0}', space=smem, size = 0x200, scoped, tag = 'prefetched SMEM operand 0']
  %s0 = inlined_call_operand.hbm [shape: s32[2], index: 0, kind: input, shape index: {}]
  %s1 = inlined_call_operand.hbm [shape: s32[2,1,16], index: 1, kind: input, shape index: {}]
  %s2 = inlined_call_operand.hbm [shape: f32[2,16,32], index: 2, kind: input, shape index: {}]
  %s3 = inlined_call_operand.hbm [shape: f32[2,32,256], index: 3, kind: output, shape index: {}]
  %s4 = sld [smem:[#allocation0]]
  $region61: #{tpu_custom_call.1} parent=0
    _
  %s6 = ssub.s32 1, %s4
  %s7 = scalar_select 0, %s6, %s4
  %9 = dma.hbm_to_smem %s0, 16, [#allocation5], [#allocation4]
  %10 = dma.done [#allocation4], 16
  %11 = sfence
  $region1: #{tpu_custom_call.1} parent=0
    #allocation6 [shape = 'u8[1024]{0}', space=vmem, size = 0x400, scoped, tag = 'input window, operand 1']
    #allocation7 [shape = 's32[2]{0}', space=sflag, size = 0x8, scoped, tag = 'scoped memory for tpu_custom_call.1']
    #allocation8 [shape = 's32[2]{0}', space=sflag, size = 0x8, scoped, tag = 'scoped memory for tpu_custom_call.1']
    #allocation9 [shape = 'u8[16384]{0}', space=vmem, size = 0x4000, scoped, tag = 'input window, operand 2']
    #allocation10 [shape = 's32[2]{0}', space=sflag, size = 0x8, scoped, tag = 'scoped memory for tpu_custom_call.1']
    #allocation11 [shape = 'u8[65536]{0}', space=vmem, size = 0x10000, scoped, tag = 'output window, operand 0']
    %12 = vsyncpa [#allocation7], 0
    %s13 = scalar_lea.sflag [#allocation7], 1
    %14 = vsyncpa %s13, 0
    %15 = vsyncpa [#allocation10], 0
    %s16 = scalar_lea.sflag [#allocation10], 1
    %17 = vsyncpa %s16, 0
    %18 = vsyncpa [#allocation8], 0
    %s19 = scalar_lea.sflag [#allocation8], 1
    %20 = vsyncpa %s19, 0
    loop: start=0, step=1, limit=4
    $region2: #{tpu_custom_call.1} parent=1 // loop_pre_header
      _
    $region3: #{tpu_custom_call.1} parent=1 // loop_header
      %s22 = sphi 0, %s26
      %p23 = scmp.ge.s32.totalorder %s22, 4
      %s29 = sphi 0, %s41
      %s30 = sphi 0, %s37
      %s31 = sphi 0, %s29
      %s32 = sphi 0, %s30
      %s33 = sphi 0, %s31
      %s34 = sphi 0, %s32
      %s44 = sphi 0, %s46
      %s47 = sphi 0, %s44
      %s48 = sphi 0, %s47
      %s64 = sphi 0, %s48
      %s70 = sphi 0, %s72
      %s73 = sphi 0, %s70
      %s74 = sphi 0, %s73
      %s90 = sphi 0, %s74
      %s98 = sphi 0, %s100
      %s101 = sphi 0, %s98
      %s102 = sphi 0, %s101
      %s118 = sphi 0, %s102
    $region4: #{tpu_custom_call.1} parent=1 // loop_header_branch
      %25 = sbr.rel (%p23) target = $region8
    $region5: #{tpu_custom_call.1} parent=1 // loop_body
      %s27 = ssub.s32 %s22, 1
      %s28 = ssub.s32 %s22, 2
      %s35 = sadd.s32 1, %s30
      %p36 = scmp.ge.s32.totalorder %s35, 1
      %s37 = scalar_select %p36, 0, %s35
      %s38 = sadd.s32 1, %s29
      %s39 = scalar_select %p36, %s38, %s29
      %p40 = scmp.ge.s32.totalorder %s39, 2
      %s41 = scalar_select %p40, 0, %s39
      %s42 = ssub.s32 %s29, %s41
      %p43 = scmp.eq.s32.totalorder %s42, 0
      %s45 = sadd.s32 %s44, 1
      %s46 = scalar_select %p43, %s44, %s45
      %p49 = pneg %p43
      %p50 = scmp.eq.s32.totalorder %s22, 1
      %p51 = por %p49, %p50
      %p52 = scmp.ne.s32.totalorder %s44, %s47
      %p53 = scmp.eq.s32.totalorder %s22, 0
      %p54 = por %p52, %p53
      %p55 = scmp.ne.s32.totalorder %s44, %s47
      %p56 = scmp.eq.s32.totalorder %s27, 1
      %p57 = por %p55, %p56
      %p58 = scmp.ne.s32.totalorder %s47, %s48
      %p59 = scmp.eq.s32.totalorder %s27, 0
      %p60 = por %p58, %p59
      %p61 = scmp.ne.s32.totalorder %s47, %s48
      %p62 = scmp.eq.s32.totalorder %s28, 1
      %p63 = por %p61, %p62
      %p65 = scmp.ne.s32.totalorder %s48, %s64
      %p66 = scmp.eq.s32.totalorder %s28, 0
      %p67 = por %p65, %p66
      %s68 = ssub.s32 %s29, %s41
      %p69 = scmp.eq.s32.totalorder %s68, 0
      %s71 = sadd.s32 %s70, 1
      %s72 = scalar_select %p69, %s70, %s71
      %p75 = pneg %p69
      %p76 = scmp.eq.s32.totalorder %s22, 1
      %p77 = por %p75, %p76
      %p78 = scmp.ne.s32.totalorder %s70, %s73
      %p79 = scmp.eq.s32.totalorder %s22, 0
      %p80 = por %p78, %p79
      %p81 = scmp.ne.s32.totalorder %s70, %s73
      %p82 = scmp.eq.s32.totalorder %s27, 1
      %p83 = por %p81, %p82
      %p84 = scmp.ne.s32.totalorder %s73, %s74
      %p85 = scmp.eq.s32.totalorder %s27, 0
      %p86 = por %p84, %p85
      %p87 = scmp.ne.s32.totalorder %s73, %s74
      %p88 = scmp.eq.s32.totalorder %s28, 1
      %p89 = por %p87, %p88
      %p91 = scmp.ne.s32.totalorder %s74, %s90
      %p92 = scmp.eq.s32.totalorder %s28, 0
      %p93 = por %p91, %p92
      %s94 = ssub.s32 %s29, %s41
      %s95 = ssub.s32 %s30, %s37
      %s96 = sor.u32 %s94, %s95
      %p97 = scmp.eq.s32.totalorder %s96, 0
      %s99 = sadd.s32 %s98, 1
      %s100 = scalar_select %p97, %s98, %s99
      %p103 = pneg %p97
      %p104 = scmp.eq.s32.totalorder %s22, 1
      %p105 = por %p103, %p104
      %p106 = scmp.ne.s32.totalorder %s98, %s101
      %p107 = scmp.eq.s32.totalorder %s22, 0
      %p108 = por %p106, %p107
      %p109 = scmp.ne.s32.totalorder %s98, %s101
      %p110 = scmp.eq.s32.totalorder %s27, 1
      %p111 = por %p109, %p110
      %p112 = scmp.ne.s32.totalorder %s101, %s102
      %p113 = scmp.eq.s32.totalorder %s27, 0
      %p114 = por %p112, %p113
      %p115 = scmp.ne.s32.totalorder %s101, %s102
      %p116 = scmp.eq.s32.totalorder %s28, 1
      %p117 = por %p115, %p116
      %p119 = scmp.ne.s32.totalorder %s102, %s118
      %p120 = scmp.eq.s32.totalorder %s28, 0
      %p121 = por %p119, %p120
      %p122 = scmp.le.s32.totalorder 1, %s22
      %p123 = scmp.lt.s32.totalorder %s22, 3
      %p124 = pnand %p122, %p123
      %p125 = pneg %p124
      // Predicated region
      $region9: #{tpu_custom_call.1} parent=5 // pred_check
        _
      $region10: #{tpu_custom_call.1} parent=5 // pred_check_branch
        %127 = sbr.rel (%p124) target = $region12
      $region11: #{tpu_custom_call.1} parent=5 // pred_region
        %s128 = ssub.s32 %s22, 1
      $region12: #{tpu_custom_call.1} parent=5 // pred_fallthru
        _
      %p129 = scmp.lt.s32.totalorder %s22, 2
      // Predicated region
      $region13: #{tpu_custom_call.1} parent=5 // pred_check
        %p130 = pneg %p129
      $region14: #{tpu_custom_call.1} parent=5 // pred_check_branch
        %132 = sbr.rel (%p130) target = $region16
      $region15: #{tpu_custom_call.1} parent=5 // pred_region
        // Predicated region
        $region17: #{tpu_custom_call.1} parent=15 // pred_check
          %p133 = pneg %p54
        $region18: #{tpu_custom_call.1} parent=15 // pred_check_branch
          %135 = sbr.rel (%p133) target = $region20
        $region19: #{tpu_custom_call.1} parent=15 // pred_region
          %s136 = sand.u32 %s44, 1
          %s137 = scalar_lea.sflag [#allocation7], %s136
          %s138 = sand.u32 %s44, 1
          %s139 = scalar_lea.vmem [#allocation6], %s138
          %s141 = ssub.s32 16, 16
          %142 = vsyncadd %s137, %s141
          %s143 = smul.addr %s29, 16
          %s144 = scalar_lea.hbm %s1, %s143
          %s146 = sshll.u32 %s139, 4
          %s147 = int_to_ptr.vmem [resolvable:$true] %s146
          %149 = dma.hbm_to_vmem [thread:$0]  %s144, 16, %s147, %s137
        $region20: #{tpu_custom_call.1} parent=15 // pred_fallthru
          _
        // Predicated region
        $region21: #{tpu_custom_call.1} parent=15 // pred_check
          %p150 = pneg %p80
        $region22: #{tpu_custom_call.1} parent=15 // pred_check_branch
          %152 = sbr.rel (%p150) target = $region24
        $region23: #{tpu_custom_call.1} parent=15 // pred_region
          %s153 = sand.u32 %s70, 1
          %s154 = scalar_lea.sflag [#allocation10], %s153
          %s155 = sand.u32 %s70, 1
          %s156 = smul.addr %s155, 16
          %s157 = scalar_lea.vmem [#allocation9], %s156
          %s159 = ssub.s32 256, 256
          %160 = vsyncadd %s154, %s159
          %s161 = smul.addr %s29, 2
          %s162 = smul.addr %s161, 128
          %s163 = scalar_lea.hbm %s2, %s162
          %s164 = sshll.u32 %s157, 4
          %s165 = int_to_ptr.vmem [resolvable:$true] %s164
          %170 = dma.hbm_to_vmem [thread:$0]  %s163, 256, %s165, %s154, 128, 128, 8
        $region24: #{tpu_custom_call.1} parent=15 // pred_fallthru
          _
      $region16: #{tpu_custom_call.1} parent=5 // pred_fallthru
        _
      %p171 = scmp.le.s32.totalorder 1, %s22
      %p172 = scmp.lt.s32.totalorder %s22, 3
      %p173 = pnand %p171, %p172
      %p174 = pneg %p173
      // Predicated region
      $region25: #{tpu_custom_call.1} parent=5 // pred_check
        _
      $region26: #{tpu_custom_call.1} parent=5 // pred_check_branch
        %176 = sbr.rel (%p173) target = $region28
      $region27: #{tpu_custom_call.1} parent=5 // pred_region
        %s177 = ssub.s32 %s22, 1
        %s178 = sand.u32 %s47, 1
        %s179 = scalar_lea.sflag [#allocation7], %s178
        %s180 = sand.u32 %s47, 1
        %s181 = scalar_lea.vmem [#allocation6], %s180
        // Predicated region
        $region29: #{tpu_custom_call.1} parent=27 // pred_check
          %p182 = pneg %p60
        $region30: #{tpu_custom_call.1} parent=27 // pred_check_branch
          %184 = sbr.rel (%p182) target = $region32
        $region31: #{tpu_custom_call.1} parent=27 // pred_region
          %185 = dma.done %s179, 16
        $region32: #{tpu_custom_call.1} parent=27 // pred_fallthru
          _
        %s186 = sand.u32 %s73, 1
        %s187 = scalar_lea.sflag [#allocation10], %s186
        %s188 = sand.u32 %s73, 1
        %s189 = smul.addr %s188, 16
        %s190 = scalar_lea.vmem [#allocation9], %s189
        // Predicated region
        $region33: #{tpu_custom_call.1} parent=27 // pred_check
          %p191 = pneg %p86
        $region34: #{tpu_custom_call.1} parent=27 // pred_check_branch
          %193 = sbr.rel (%p191) target = $region36
        $region35: #{tpu_custom_call.1} parent=27 // pred_region
          %194 = dma.done %s187, 256
        $region36: #{tpu_custom_call.1} parent=27 // pred_fallthru
          _
        %s195 = sand.u32 %s47, 1
        %s196 = scalar_lea.sflag [#allocation7], %s195
        %s197 = sand.u32 %s47, 1
        %s198 = scalar_lea.vmem [#allocation6], %s197
        %p199 = pneg %p60
        %p200 = pneg %p57
        %s201 = sand.u32 %s73, 1
        %s202 = scalar_lea.sflag [#allocation10], %s201
        %s203 = sand.u32 %s73, 1
        %s204 = smul.addr %s203, 16
        %s205 = scalar_lea.vmem [#allocation9], %s204
        %p206 = pneg %p86
        %p207 = pneg %p83
        %p208 = pneg %p114
        %p209 = pneg %p111
        %s210 = sand.u32 %s101, 1
        %s211 = scalar_lea.sflag [#allocation8], %s210
        %s212 = sand.u32 %s101, 1
        %s213 = smul.addr %s212, 64
        %s214 = scalar_lea.vmem [#allocation11], %s213
        %s215 = smul.u32 2, %s32
        %p217 = scmp.eq.s32.totalorder %s32, 0
        // Predicated region
        $region37: #{tpu_custom_call.1} parent=27 // pred_check
          %p218 = pneg %p217
        $region38: #{tpu_custom_call.1} parent=27 // pred_check_branch
          %220 = sbr.rel (%p218) target = $region40
        $region39: #{tpu_custom_call.1} parent=27 // pred_region
          %v221 = vld [vmem:[%s190] sm:$0xff]
          %v222 = vld [vmem:[%s190 + $0x8] sm:$0xff]
          %v223 = vpack.c.bf16 %v222, %v221
          %v225 = vunpack.c.l.b16 %v223
          %v226 = vunpack.c.h.b16 %v223
          %v227 = vpack.c.b16 %v225, %v225
          %v228 = vpack.c.b16 %v226, %v226
          %vm231 = vcmask 257024
          %232 = vst.msk [vmem:[#allocation2] sm:$0xf] %vm231, %v227
          %233 = vst.msk [vmem:[#allocation2 + $0x4] sm:$0xf] %vm231, %v228
          %v234 = vld [vmem:[%s181] sm:$0x1]
          %235 = vxpose.xlu0.b32.start [1/16] %v234, 128
          %236 = vxpose.xlu0.b32.cont [2/16] 0, 128
          %237 = vxpose.xlu0.b32.cont [3/16] 0, 128
          %238 = vxpose.xlu0.b32.cont [4/16] 0, 128
          %239 = vxpose.xlu0.b32.cont [5/16] 0, 128
          %240 = vxpose.xlu0.b32.cont [6/16] 0, 128
          %241 = vxpose.xlu0.b32.cont [7/16] 0, 128
          %242 = vxpose.xlu0.b32.cont [8/16] 0, 128
          %243 = vxpose.xlu0.b32.cont [9/16] 0, 128
          %244 = vxpose.xlu0.b32.cont [10/16] 0, 128
          %245 = vxpose.xlu0.b32.cont [11/16] 0, 128
          %246 = vxpose.xlu0.b32.cont [12/16] 0, 128
          %247 = vxpose.xlu0.b32.cont [13/16] 0, 128
          %248 = vxpose.xlu0.b32.cont [14/16] 0, 128
          %249 = vxpose.xlu0.b32.cont [15/16] 0, 128
          %250 = vxpose.xlu0.b32.end [16/16] 0, 128
          %v251 = vpop.trf.xlu0
          %v252 = vpop.trf.xlu0
          %v253 = vpop.trf.xlu0
          %v254 = vpop.trf.xlu0
          %v255 = vpop.trf.xlu0
          %v256 = vpop.trf.xlu0
          %v257 = vpop.trf.xlu0
          %v258 = vpop.trf.xlu0
          %v259 = vpop.trf.xlu0
          %v260 = vpop.trf.xlu0
          %v261 = vpop.trf.xlu0
          %v262 = vpop.trf.xlu0
          %v263 = vpop.trf.xlu0
          %v264 = vpop.trf.xlu0
          %v265 = vpop.trf.xlu0
          %v266 = vpop.trf.xlu0
          %vm267 = vcmask 7168
          %268 = vst.msk [vmem:[#allocation3] sm:$0xff] %vm267, %v251
          %269 = vst.msk [vmem:[#allocation3 + $0x8] sm:$0xff] %vm267, %v252
        $region40: #{tpu_custom_call.1} parent=27 // pred_fallthru
          _
        %s270 = sadd.s32 %s31, %s32
        %s271 = sld [smem:[#allocation5 + %s270]]
        %p272 = scmp.eq.s32.totalorder %s271, 0
        // Predicated region
        $region41: #{tpu_custom_call.1} parent=27 // pred_check
          %p273 = pneg %p272
        $region42: #{tpu_custom_call.1} parent=27 // pred_check_branch
          %275 = sbr.rel (%p273) target = $region44
        $region43: #{tpu_custom_call.1} parent=27 // pred_region
          %276 = vst [vmem:[%s214] sm:$0xff] 0.0
          %277 = vst [vmem:[%s214 + $0x8] sm:$0xff] 0.0
          %278 = vst [vmem:[%s214 + $0x10] sm:$0xff] 0.0
          %279 = vst [vmem:[%s214 + $0x18] sm:$0xff] 0.0
          %280 = vst [vmem:[%s214 + $0x20] sm:$0xff] 0.0
          %281 = vst [vmem:[%s214 + $0x28] sm:$0xff] 0.0
          %282 = vst [vmem:[%s214 + $0x30] sm:$0xff] 0.0
          %283 = vst [vmem:[%s214 + $0x38] sm:$0xff] 0.0
        $region44: #{tpu_custom_call.1} parent=27 // pred_fallthru
          _
        %p284 = scmp.gt.s32.totalorder %s271, 0
        // Predicated region
        $region45: #{tpu_custom_call.1} parent=27 // pred_check
          %p285 = pneg %p284
        $region46: #{tpu_custom_call.1} parent=27 // pred_check_branch
          %287 = sbr.rel (%p285) target = $region48
        $region47: #{tpu_custom_call.1} parent=27 // pred_region
          %v288 = vld [vmem:[#allocation2] sm:$0xf]
          %v289 = vld [vmem:[#allocation2 + $0x4] sm:$0xf]
          %v290 = vld [vmem:[#allocation3] sm:$0xff]
          %v291 = vld [vmem:[#allocation3 + $0x8] sm:$0xff]
          %s292 = smul.u32 %s32, 256
          %v293 = vstv %s292
          %v294 = vsub.s32 %v290, %v293
          %v295 = vsub.s32 %v291, %v293
          %v296 = vlaneseq
          %v297 = vand.u32 %v296, 127
          %v298 = vadd.s32 %v297, 128
          %v299 = vstv 0
          %v300 = vsub.s32 %v294, %v299
          %v301 = vsub.s32 %v295, %v299
          %302 = vset.pattern.permute.xlu0 0
          %303 = vperm.xlu0 %302, %v300
          %v304 = vpop.permute.xlu0 %303
          %305 = vset.pattern.permute.xlu0 0
          %306 = vperm.xlu0 %305, %v301
          %v307 = vpop.permute.xlu0 %306
          %vm308 = vcmp.eq.s32.totalorder %v297, %v304
          %vm309 = vcmp.eq.s32.totalorder %v298, %v304
          %vm310 = vcmp.eq.s32.totalorder %v297, %v307
          %vm311 = vcmp.eq.s32.totalorder %v298, %v307
          %v312 = vsel %vm308, 1, 0
          %v313 = vsel %vm309, 1, 0
          %v314 = vsel %vm310, 1, 0
          %v315 = vsel %vm311, 1, 0
          %v316 = vcvt.s32.f32 %v312
          %v317 = vcvt.s32.f32 %v313
          %v318 = vcvt.s32.f32 %v314
          %v319 = vcvt.s32.f32 %v315
          %v320 = vpack.c.bf16 %v318, %v316
          %v321 = vpack.c.bf16 %v319, %v317
          %v324 = vunpack.c.l.b16 %v288
          %v325 = vunpack.c.l.b16 %v289
          %v326 = vpack.c.b16 %v325, %v324
          %328 = vxpose.xlu0.c.b16.start [1/8] %v326, 128
          %329 = vxpose.xlu0.c.b16.cont [2/8] 0, 128
          %330 = vxpose.xlu0.c.b16.cont [3/8] 0, 128
          %331 = vxpose.xlu0.c.b16.cont [4/8] 0, 128
          %332 = vxpose.xlu0.c.b16.cont [5/8] 0, 128
          %333 = vxpose.xlu0.c.b16.cont [6/8] 0, 128
          %334 = vxpose.xlu0.c.b16.cont [7/8] 0, 128
          %335 = vxpose.xlu0.c.b16.end [8/8] 0, 128
          %v336 = vpop.trf.xlu0
          %v337 = vpop.trf.xlu0
          %v338 = vpop.trf.xlu0
          %v339 = vpop.trf.xlu0
          %v340 = vpop.trf.xlu0
          %v341 = vpop.trf.xlu0
          %v342 = vpop.trf.xlu0
          %v343 = vpop.trf.xlu0
          %vm344 = vcmask 130048
          %v346 = vsel %vm344, %v336, 0
          %v349 = vsel %vm344, %v337, 0
          %351 = vmatprep.subr.bf16.mxu0 0
          %352 = vmatpush1.bf16.msra.mxu0 0
          %353 = vmatprep.subr.bf16.mxu0 0
          %354 = vmatpush1.bf16.msra.mxu0 0
          %355 = vmatprep.subr.bf16.mxu0 0
          %356 = vmatpush1.bf16.msra.mxu0 0
          %357 = vmatprep.subr.bf16.mxu0 0
          %358 = vmatpush1.bf16.msra.mxu0 0
          %359 = vmatprep.subr.bf16.mxu0 0
          %360 = vmatpush1.bf16.msra.mxu0 0
          %361 = vmatprep.subr.bf16.mxu0 0
          %362 = vmatpush1.bf16.msra.mxu0 0
          %363 = vmatprep.subr.bf16.mxu0 0
          %364 = vmatpush1.bf16.msra.mxu0 0
          %365 = vmatprep.subr.bf16.mxu0 %v321
          %366 = vmatpush1.bf16.msra.mxu0 %v320
          %367 = vmatprep.subr.bf16.mxu0 0
          %368 = vmatpush2.bf16.msra.mxu0 0
          %369 = vmatprep.subr.bf16.mxu0 0
          %370 = vmatpush2.bf16.msra.mxu0 0
          %371 = vmatprep.subr.bf16.mxu0 0
          %372 = vmatpush2.bf16.msra.mxu0 0
          %373 = vmatprep.subr.bf16.mxu0 0
          %374 = vmatpush2.bf16.msra.mxu0 0
          %375 = vmatprep.subr.bf16.mxu0 0
          %376 = vmatpush2.bf16.msra.mxu0 0
          %377 = vmatprep.subr.bf16.mxu0 0
          %378 = vmatpush2.bf16.msra.mxu0 0
          %379 = vmatprep.subr.bf16.mxu0 0
          %380 = vmatpush2.bf16.msra.mxu0 0
          %381 = vmatprep.subr.bf16.mxu0 0
          %382 = vmatpush2.bf16.msra.mxu0 0
          %383 = vmatprep.mubr.bf16.mxu0 0
          %384 = vmatmul.mubr.bf16.gmra.mxu0 %v346
          %v385 = vpop.f32.mrf.mxu0
          %v386 = vadd.f32 0.0, %v385
          %v387 = vpop.f32.mrf.mxu0
          %v388 = vadd.f32 0.0, %v387
          %v389 = vpop.f32.mrf.mxu0
          %v390 = vadd.f32 0.0, %v389
          %v391 = vpop.f32.mrf.mxu0
          %v392 = vadd.f32 0.0, %v391
          %393 = vmatprep.mubr.bf16.mxu0 0
          %394 = vmatmul.mubr.bf16.gmra.mxu0 %v349
          %v395 = vpop.f32.mrf.mxu0
          %v396 = vadd.f32 0.0, %v395
          %v397 = vpop.f32.mrf.mxu0
          %v398 = vadd.f32 0.0, %v397
          %v399 = vpop.f32.mrf.mxu0
          %v400 = vadd.f32 0.0, %v399
          %v401 = vpop.f32.mrf.mxu0
          %v402 = vadd.f32 0.0, %v401
          %403 = vdwg.mxu0
          %404 = vst [vmem:[%s214] sm:$0xff] %v386
          %405 = vst [vmem:[%s214 + $0x8] sm:$0xff] %v388
          %406 = vst [vmem:[%s214 + $0x10] sm:$0xff] %v390
          %407 = vst [vmem:[%s214 + $0x18] sm:$0xff] %v392
          %408 = vst [vmem:[%s214 + $0x20] sm:$0xff] %v396
          %409 = vst [vmem:[%s214 + $0x28] sm:$0xff] %v398
          %410 = vst [vmem:[%s214 + $0x30] sm:$0xff] %v400
          %411 = vst [vmem:[%s214 + $0x38] sm:$0xff] %v402
        $region48: #{tpu_custom_call.1} parent=27 // pred_fallthru
          _
        %s412 = sand.u32 %s101, 1
        %s413 = scalar_lea.sflag [#allocation8], %s412
        %s414 = sand.u32 %s101, 1
        %s415 = smul.addr %s414, 64
        %s416 = scalar_lea.vmem [#allocation11], %s415
        // Predicated region
        $region49: #{tpu_custom_call.1} parent=27 // pred_check
          %p417 = pneg %p111
        $region50: #{tpu_custom_call.1} parent=27 // pred_check_branch
          %419 = sbr.rel (%p417) target = $region52
        $region51: #{tpu_custom_call.1} parent=27 // pred_region
          %s420 = smul.u32 2, %s32
          %s422 = ssub.s32 1024, 1024
          %423 = vsyncadd %s413, %s422
          %s424 = smul.addr %s31, 8
          %s425 = sadd.s32 %s420, %s424
          %s426 = smul.addr %s425, 128
          %s427 = scalar_lea.hbm %s3, %s426
          %s428 = sshll.u32 %s416, 4
          %s429 = int_to_ptr.vmem [resolvable:$true] %s428
          %434 = dma.vmem_to_hbm [thread:$0]  %s429, 1024, %s427, %s413, 256, 256, 16
        $region52: #{tpu_custom_call.1} parent=27 // pred_fallthru
          _
      $region28: #{tpu_custom_call.1} parent=5 // pred_fallthru
        _
      %p435 = scmp.le.s32.totalorder 2, %s22
      // Predicated region
      $region53: #{tpu_custom_call.1} parent=5 // pred_check
        %p436 = pneg %p435
      $region54: #{tpu_custom_call.1} parent=5 // pred_check_branch
        %438 = sbr.rel (%p436) target = $region56
      $region55: #{tpu_custom_call.1} parent=5 // pred_region
        %s439 = ssub.s32 %s22, 2
        // Predicated region
        $region57: #{tpu_custom_call.1} parent=55 // pred_check
          %p440 = pneg %p117
        $region58: #{tpu_custom_call.1} parent=55 // pred_check_branch
          %442 = sbr.rel (%p440) target = $region60
        $region59: #{tpu_custom_call.1} parent=55 // pred_region
          %s443 = sand.u32 %s102, 1
          %s444 = scalar_lea.sflag [#allocation8], %s443
          %s445 = sand.u32 %s102, 1
          %s446 = smul.addr %s445, 64
          %s447 = scalar_lea.vmem [#allocation11], %s446
          %448 = dma.done %s444, 1024
        $region60: #{tpu_custom_call.1} parent=55 // pred_fallthru
          _
      $region56: #{tpu_custom_call.1} parent=5 // pred_fallthru
        _
    $region6: #{tpu_custom_call.1} parent=1 // loop_footer
      %s26 = sadd.s32 1, %s22
    $region7: #{tpu_custom_call.1} parent=1 // loop_footer_branch
      %21 = sbr.rel target = $region3
    $region8: #{tpu_custom_call.1} parent=1 // loop_exit
      _
    %449 = vsyncpa [#allocation7], 1
    %s450 = scalar_lea.sflag [#allocation7], 1
    %451 = vsyncpa %s450, 1
    %452 = vsyncpa [#allocation10], 1
    %s453 = scalar_lea.sflag [#allocation10], 1
    %454 = vsyncpa %s453, 1
    %455 = vsyncpa [#allocation8], 1
    %s456 = scalar_lea.sflag [#allocation8], 1
    %457 = vsyncpa %s456, 1

</llo_original>
